<compile_context>
chip_gen: v7x
topology: tpu7x:2x2x1
jax: 0.10.0
libtpu: 0.0.40
codegen_flags: <defaults>
</compile_context>

<pallas_src>
import jax
import jax.numpy as jnp
from jax.experimental import pallas as pl
from jax.experimental.pallas import tpu as pltpu


# ----------------------------- tiling helpers ------------------------------

def _round_up(x: int, m: int) -> int:
    return ((x + m - 1) // m) * m


def _sublane_for(dtype) -> int:
    size = jnp.dtype(dtype).itemsize
    if size >= 4:
        return 8
    if size == 2:
        return 16
    return 32


_TILE_LADDER = (512, 384, 256, 128)
_K_LADDER = (4096, 3072, 2048, 1536, 1024, 768, 512, 384, 256, 128)
_VMEM_BUDGET = 24 * 1024 * 1024        # comfortable on v5e/v6e/v7x scoped VMEM
_VMEM_LIMIT = 32 * 1024 * 1024         # explicit scoped limit (v5e default is 16 MiB)
_TM_CAP = 512
_TN_CAP = 512
_MEGACORE_MIN_WORK = 1 << 22           # only split a 1x1 grid if there is real work


def _pick_tile(dim: int, align: int, cap: int) -> int:
    """Full (aligned) dim when it fits under cap, else ladder entry minimizing padding."""
    if dim <= cap:
        return max(_round_up(dim, align), align)
    best, best_pad = None, None
    for t in _TILE_LADDER:
        if t > cap or t % align:
            continue
        pad = _round_up(dim, t)
        if best_pad is None or pad < best_pad:
            best, best_pad = t, pad
    return best


def _pick_k_tile(K: int, tn: int, in_bytes: int) -> int:
    """Largest tk that keeps the double-buffered footprint under budget; prefer tk == Kp."""
    out_bytes = 4  # conservative (f32 output / accumulator)
    fixed = 2 * _TM_CAP * tn * out_bytes + _TM_CAP * tn * 4 + 2 * tn * 4
    per_k = (2 * _TM_CAP + 3 * tn) * in_bytes
    max_tk = max(128, ((_VMEM_BUDGET - fixed) // per_k) // 128 * 128)
    kp_full = _round_up(max(K, 1), 128)
    if kp_full <= max_tk:
        return kp_full                      # single K block -> no accumulator needed
    best, best_pad = None, None
    for t in _K_LADDER:
        if t > max_tk:
            continue
        pad = _round_up(K, t)
        if best_pad is None or pad < best_pad:
            best, best_pad = t, pad
    return best


# ----------------------------- kernel bodies -------------------------------

def _mm_bias_kernel(x_ref, wt_ref, b_ref, o_ref):
    acc = jnp.dot(x_ref[...], wt_ref[...], preferred_element_type=jnp.float32)
    o_ref[...] = (acc + b_ref[...]).astype(o_ref.dtype)


def _mm_nobias_kernel(x_ref, wt_ref, o_ref):
    o_ref[...] = jnp.dot(
        x_ref[...], wt_ref[...], preferred_element_type=jnp.float32
    ).astype(o_ref.dtype)


def _mm_acc_bias_kernel(x_ref, wt_ref, b_ref, o_ref, acc_ref):
    k = pl.program_id(2)
    contrib = jnp.dot(x_ref[...], wt_ref[...], preferred_element_type=jnp.float32)

    @pl.when(k == 0)
    def _():
        acc_ref[...] = contrib          # no tm*tn zero-fill on the first K step

    @pl.when(k > 0)
    def _():
        acc_ref[...] += contrib

    @pl.when(k == pl.num_programs(2) - 1)
    def _():
        o_ref[...] = (acc_ref[...] + b_ref[...]).astype(o_ref.dtype)


def _mm_acc_nobias_kernel(x_ref, wt_ref, o_ref, acc_ref):
    k = pl.program_id(2)
    contrib = jnp.dot(x_ref[...], wt_ref[...], preferred_element_type=jnp.float32)

    @pl.when(k == 0)
    def _():
        acc_ref[...] = contrib

    @pl.when(k > 0)
    def _():
        acc_ref[...] += contrib

    @pl.when(k == pl.num_programs(2) - 1)
    def _():
        o_ref[...] = acc_ref[...].astype(o_ref.dtype)


# --------------------------- weight preparation ----------------------------

def prepare_linear_weights(weight, bias=None, compute_dtype=jnp.float32):
    """One-time relayout: W (out, in) -> padded W^T (Kp, Np), padded f32 bias.

    Hoisted out of the per-call path so forward() never re-pays the weight-sized
    HBM transpose/pad traffic.
    """
    out_features, in_features = weight.shape
    K, N = in_features, out_features
    compute_dtype = jnp.dtype(compute_dtype)
    in_bytes = compute_dtype.itemsize

    tn = _pick_tile(max(N, 1), 128, _TN_CAP)
    tk = _pick_k_tile(K, tn, in_bytes)
    Kp = _round_up(max(K, 1), tk)
    Np = _round_up(max(N, 1), tn)

    w_t = jnp.transpose(weight).astype(compute_dtype)        # (K, N)
    if (Kp, Np) != (K, N):
        w_t = jnp.pad(w_t, ((0, Kp - K), (0, Np - N)))

    b2d = None
    if bias is not None:
        b2d = bias.reshape(1, N).astype(jnp.float32)
        if Np != N:
            b2d = jnp.pad(b2d, ((0, 0), (0, Np - N)))

    return dict(w_t=w_t, b2d=b2d, K=K, N=N, Kp=Kp, Np=Np, tk=tk, tn=tn,
                compute_dtype=compute_dtype)


# -------------------------------- forward ----------------------------------

def linear_forward_prepared(x, prep):
    """y = x @ W.T + b with cached/padded W^T (PyTorch Linear semantics)."""
    K, N = prep["K"], prep["N"]
    Kp, Np, tk, tn = prep["Kp"], prep["Np"], prep["tk"], prep["tn"]
    w_t, b2d = prep["w_t"], prep["b2d"]
    compute_dtype = prep["compute_dtype"]

    *lead, in_features = x.shape
    assert in_features == K, f"expected last dim {K}, got {in_features}"
    out_dtype = x.dtype

    M = 1
    for d in lead:
        M *= d

    # Degenerate shapes: no kernel launch.
    if M == 0:
        return jnp.zeros((*lead, N), dtype=out_dtype)
    if K == 0:
        base = jnp.zeros((*lead, N), dtype=jnp.float32)
        if b2d is not None:
            base = base + b2d[0, :N]
        return base.astype(out_dtype)

    x2d = x.reshape(M, K).astype(compute_dtype)

    sublane = _sublane_for(compute_dtype)
    tm = _pick_tile(M, sublane, _TM_CAP)
    Mp = _round_up(M, tm)

    grid_m, grid_n, grid_k = Mp // tm, Np // tn, Kp // tk

    # v7x megacore: make sure at least one parallel axis has >= 2 blocks when
    # there is enough work, so both TensorCores are engaged.
    if grid_m * grid_n == 1 and Mp * Np * Kp >= _MEGACORE_MIN_WORK:
        if tn % 256 == 0:
            tn = tn // 2
            grid_n = Np // tn
        elif tm % (2 * sublane) == 0 and M > tm // 2:
            tm = tm // 2
            Mp = _round_up(M, tm)
            grid_m = Mp // tm

    if (Mp, Kp) != (M, K):
        x2d = jnp.pad(x2d, ((0, Mp - M), (0, Kp - K)))

    single_k = (grid_k == 1)
    use_bias = b2d is not None

    # Explicit scoped-VMEM limit (footprint is budgeted to < 24 MiB).
    in_bytes = jnp.dtype(compute_dtype).itemsize
    out_bytes = jnp.dtype(out_dtype).itemsize
    w_bufs = 3 if (grid_m == 1 and not single_k) else 2
    est = (2 * tm * tk * in_bytes + w_bufs * tk * tn * in_bytes
           + 2 * tm * tn * out_bytes
           + (0 if single_k else tm * tn * 4)
           + (2 * tn * 4 if use_bias else 0))
    vmem_limit = max(_VMEM_LIMIT, int(est * 1.25))

    if single_k:
        grid = (grid_m, grid_n)
        x_spec = pl.BlockSpec((tm, tk), lambda i, j: (i, 0))
        w_spec = pl.BlockSpec((tk, tn), lambda i, j: (0, j))
        b_spec = pl.BlockSpec((1, tn), lambda i, j: (0, j))
        o_spec = pl.BlockSpec((tm, tn), lambda i, j: (i, j))
        dims = ("parallel", "parallel")
        scratch = []
        kernel = _mm_bias_kernel if use_bias else _mm_nobias_kernel
    else:
        grid = (grid_m, grid_n, grid_k)
        x_spec = pl.BlockSpec((tm, tk), lambda i, j, k: (i, k))
        if grid_m == 1:
            # weight-bandwidth-bound (small M): triple-buffer the W^T stream.
            w_spec = pl.BlockSpec((tk, tn), lambda i, j, k: (k, j),
                                  pipeline_mode=pl.Buffered(3))
        else:
            w_spec = pl.BlockSpec((tk, tn), lambda i, j, k: (k, j))
        b_spec = pl.BlockSpec((1, tn), lambda i, j, k: (0, j))
        o_spec = pl.BlockSpec((tm, tn), lambda i, j, k: (i, j))
        dims = ("parallel", "parallel", "arbitrary")
        scratch = [pltpu.VMEM((tm, tn), jnp.float32)]
        kernel = _mm_acc_bias_kernel if use_bias else _mm_acc_nobias_kernel

    in_specs = [x_spec, w_spec] + ([b_spec] if use_bias else [])
    operands = (x2d, w_t) + ((b2d,) if use_bias else ())

    y2d = pl.pallas_call(
        kernel,
        out_shape=jax.ShapeDtypeStruct((Mp, Np), out_dtype),
        grid_spec=pltpu.PrefetchScalarGridSpec(
            num_scalar_prefetch=0,
            grid=grid,
            in_specs=in_specs,
            out_specs=o_spec,
            scratch_shapes=scratch,
        ),
        compiler_params=pltpu.CompilerParams(
            dimension_semantics=dims,
            vmem_limit_bytes=vmem_limit,
        ),
    )(*operands)

    return y2d[:M, :N].reshape(*lead, N)


def linear_forward(x, weight, bias=None, compute_dtype=jnp.float32):
    """Stateless convenience wrapper (re-prepares the weight; prefer LinearPallas in loops)."""
    return linear_forward_prepared(x, prepare_linear_weights(weight, bias, compute_dtype))


class LinearPallas:
    """Mirrors the reference Linear module (deterministic init, forward only).

    compute_dtype=jnp.float32 preserves PyTorch f32 Linear numerics; pass
    jnp.bfloat16 to feed the MXU bf16 inputs (f32 accumulation is kept either way).
    """

    def __init__(self, in_features: int, out_features: int, key, bias: bool = True,
                 compute_dtype=jnp.float32):
        lim = in_features ** (-0.5)
        kw, kb = jax.random.split(key)
        self.weight = jax.random.uniform(
            kw, (out_features, in_features), minval=-lim, maxval=lim, dtype=jnp.float32
        )
        if bias:
            self.bias = jax.random.uniform(
                kb, (out_features,), minval=-lim, maxval=lim, dtype=jnp.float32
            )
        else:
            self.bias = None
        # Weight relayout (transpose + pad + cast) cached once, not per forward call.
        self._prepared = prepare_linear_weights(self.weight, self.bias, compute_dtype)

    def __call__(self, x):
        return linear_forward_prepared(x, self._prepared)


if __name__ == "__main__":
    # TODO(synk): only the forward pass is implemented; the reference module's
    # autograd machinery (Recipe/backprop) has no Pallas equivalent here.
    key = jax.random.PRNGKey(0)
    k_x, k_p = jax.random.split(key)

    batch, seq, in_features, out_features = 2, 8, 32, 16
    x = jax.random.normal(k_x, (batch, seq, in_features), dtype=jnp.float32)

    lin = LinearPallas(in_features, out_features, k_p, bias=True)
    y = lin(x)
    y = jax.block_until_ready(y)

    # Correctness check against plain JAX reference.
    y_ref = x @ lin.weight.T + lin.bias
    assert y.shape == (batch, seq, out_features)
    assert y.dtype == x.dtype
    assert jnp.allclose(y, y_ref, atol=1e-5, rtol=1e-5), "mismatch vs reference"

    # Also exercise the bias=False specialized path.
    lin_nb = LinearPallas(in_features, out_features, k_p, bias=False)
    y_nb = jax.block_until_ready(lin_nb(x))
    assert jnp.allclose(y_nb, x @ lin_nb.weight.T, atol=1e-5, rtol=1e-5)

    print("KERNEL_OK")
</pallas_src>

<mosaic_0001>
module attributes {stable_mosaic.version = 11 : i64} {
  func.func @_mm_bias_kernel(%arg0: i32, %arg1: i32, %arg2: memref<16x128xf32, #tpu.memory_space<vmem>>, %arg3: memref<128x128xf32, #tpu.memory_space<vmem>>, %arg4: memref<1x128xf32, #tpu.memory_space<vmem>>, %arg5: memref<16x128xf32, #tpu.memory_space<vmem>>) attributes {dimension_semantics = [#tpu.dimension_semantics<parallel>, #tpu.dimension_semantics<parallel>], iteration_bounds = array<i64: 1, 1>, scalar_prefetch = 0 : i64, scratch_operands = 0 : i64, tpu.core_type = #tpu.core_type<tc>, window_params = [{transform_indices = @transform_0, window_bounds = array<i64: 16, 128>}, {transform_indices = @transform_1, window_bounds = array<i64: 128, 128>}, {transform_indices = @transform_2, window_bounds = array<i64: 1, 128>}, {transform_indices = @transform_3, window_bounds = array<i64: 16, 128>}]} {
    %c0 = arith.constant 0 : index
    %c0_0 = arith.constant 0 : index
    %0 = vector.load %arg2[%c0, %c0_0] : memref<16x128xf32, #tpu.memory_space<vmem>>, vector<16x128xf32>
    %c0_1 = arith.constant 0 : index
    %c0_2 = arith.constant 0 : index
    %1 = vector.load %arg3[%c0_1, %c0_2] : memref<128x128xf32, #tpu.memory_space<vmem>>, vector<128x128xf32>
    %cst = arith.constant dense<0.000000e+00> : vector<16x128xf32>
    %2 = tpu.matmul %0, %1, %cst {dimension_numbers = #tpu.dot_dimension_numbers<[1], [0], [0], [1], [0, 0, 1, 1], [], []>} : vector<16x128xf32>, vector<128x128xf32>, vector<16x128xf32> -> vector<16x128xf32>
    %c0_3 = arith.constant 0 : index
    %c0_4 = arith.constant 0 : index
    %3 = vector.load %arg4[%c0_3, %c0_4] : memref<1x128xf32, #tpu.memory_space<vmem>>, vector<1x128xf32>
    %4 = vector.broadcast %3 : vector<1x128xf32> to vector<16x128xf32>
    %5 = arith.addf %2, %4 : vector<16x128xf32>
    %c0_5 = arith.constant 0 : index
    %c0_6 = arith.constant 0 : index
    %6 = vector.load %arg5[%c0_5, %c0_6] : memref<16x128xf32, #tpu.memory_space<vmem>>, vector<16x128xf32>
    tpu.vector_store %arg5[%c0_5, %c0_6], %5 {strides = array<i32>} : memref<16x128xf32, #tpu.memory_space<vmem>>, vector<16x128xf32>,
    return
  }
  func.func @transform_0(%arg0: i32, %arg1: i32) -> (i32, i32) {
    %c0_i32 = arith.constant 0 : i32
    %c0_i32_0 = arith.constant 0 : i32
    return %arg0, %c0_i32 : i32, i32
  }
  func.func @transform_1(%arg0: i32, %arg1: i32) -> (i32, i32) {
    %c0_i32 = arith.constant 0 : i32
    %c0_i32_0 = arith.constant 0 : i32
    return %c0_i32, %arg1 : i32, i32
  }
  func.func @transform_2(%arg0: i32, %arg1: i32) -> (i32, i32) {
    %c0_i32 = arith.constant 0 : i32
    %c0_i32_0 = arith.constant 0 : i32
    return %c0_i32, %arg1 : i32, i32
  }
  func.func @transform_3(%arg0: i32, %arg1: i32) -> (i32, i32) {
    %c0_i32 = arith.constant 0 : i32
    return %arg0, %arg1 : i32, i32
  }
}

</mosaic_0001>

<llo_original>
// kernel: tpu_custom_call.1
$region0: #{tpu_custom_call.1}
  #allocation0 [shape = 'u32[]', space=smem, size = 0x4, offset = 0x4, fixed_abs, tag = 'smem constant byte address 0x4 - core index']
  #allocation1 [shape = 'u32[144,128]{1,0:T(1,128)}', space=vmem, size = 0x12000, scoped, tag = 'internal scratch']
  %s0 = inlined_call_operand.hbm [shape: f32[16,128], index: 0, kind: input, shape index: {}]
  %s1 = inlined_call_operand.hbm [shape: f32[128,128], index: 1, kind: input, shape index: {}]
  %s2 = inlined_call_operand.vmem [shape: f32[1,128], index: 2, kind: input, shape index: {}]
  %s3 = inlined_call_operand.hbm [shape: f32[16,128], index: 3, kind: output, shape index: {}]
  %s4 = sld [smem:[#allocation0]]
  $region30: #{tpu_custom_call.1} parent=0
    _
  %s6 = ssub.s32 1, %s4
  %s7 = scalar_select 0, %s6, %s4
  $region1: #{tpu_custom_call.1} parent=0
    #allocation2 [shape = 'u8[8192]{0}', space=vmem, size = 0x2000, scoped, tag = 'input window, operand 0, single buffered']
    #allocation3 [shape = 's32[1]{0}', space=sflag, size = 0x4, scoped, tag = 'scoped memory for tpu_custom_call.1']
    #allocation4 [shape = 's32[1]{0}', space=sflag, size = 0x4, scoped, tag = 'scoped memory for tpu_custom_call.1']
    #allocation5 [shape = 'u8[65536]{0}', space=vmem, size = 0x10000, scoped, tag = 'input window, operand 1, single buffered']
    #allocation6 [shape = 's32[1]{0}', space=sflag, size = 0x4, scoped, tag = 'scoped memory for tpu_custom_call.1']
    #allocation7 [shape = 'u8[8192]{0}', space=vmem, size = 0x2000, scoped, tag = 'output window, operand 0, single buffered']
    %8 = vsyncpa [#allocation3], 0
    %9 = vsyncpa [#allocation6], 0
    %10 = vsyncpa [#allocation4], 0
    // Predicated region
    $region2: #{tpu_custom_call.1} parent=1 // pred_check
      _
    $region3: #{tpu_custom_call.1} parent=1 // pred_check_branch
      %12 = sbr.rel (0) target = $region5
    $region4: #{tpu_custom_call.1} parent=1 // pred_region
      %s14 = ssub.s32 256, 256
      %15 = vsyncadd [#allocation3], %s14
      %s16 = sshll.u32 [#allocation2], 4
      %s17 = int_to_ptr.vmem [resolvable:$true] %s16
      %22 = dma.hbm_to_vmem [thread:$0]  %s0, 256, %s17, [#allocation3], 128, 128, 8
    $region5: #{tpu_custom_call.1} parent=1 // pred_fallthru
      _
    // Predicated region
    $region6: #{tpu_custom_call.1} parent=1 // pred_check
      _
    $region7: #{tpu_custom_call.1} parent=1 // pred_check_branch
      %24 = sbr.rel (0) target = $region9
    $region8: #{tpu_custom_call.1} parent=1 // pred_region
      %s26 = ssub.s32 2048, 2048
      %27 = vsyncadd [#allocation6], %s26
      %s28 = sshll.u32 [#allocation5], 4
      %s29 = int_to_ptr.vmem [resolvable:$true] %s28
      %34 = dma.hbm_to_vmem [thread:$0]  %s1, 2048, %s29, [#allocation6], 128, 128, 8
    $region9: #{tpu_custom_call.1} parent=1 // pred_fallthru
      _
    // Predicated region
    $region10: #{tpu_custom_call.1} parent=1 // pred_check
      _
    $region11: #{tpu_custom_call.1} parent=1 // pred_check_branch
      %36 = sbr.rel (0) target = $region13
    $region12: #{tpu_custom_call.1} parent=1 // pred_region
      _
    $region13: #{tpu_custom_call.1} parent=1 // pred_fallthru
      _
    // Predicated region
    $region14: #{tpu_custom_call.1} parent=1 // pred_check
      _
    $region15: #{tpu_custom_call.1} parent=1 // pred_check_branch
      %38 = sbr.rel (0) target = $region17
    $region16: #{tpu_custom_call.1} parent=1 // pred_region
      %39 = dma.done [#allocation3], 256
    $region17: #{tpu_custom_call.1} parent=1 // pred_fallthru
      _
    // Predicated region
    $region18: #{tpu_custom_call.1} parent=1 // pred_check
      _
    $region19: #{tpu_custom_call.1} parent=1 // pred_check_branch
      %41 = sbr.rel (0) target = $region21
    $region20: #{tpu_custom_call.1} parent=1 // pred_region
      %42 = dma.done [#allocation6], 2048
    $region21: #{tpu_custom_call.1} parent=1 // pred_fallthru
      _
    %v43 = vld [vmem:[#allocation2] sm:$0xff]
    %v44 = vld [vmem:[#allocation2 + $0x8] sm:$0xff]
    %v45 = vld [vmem:[#allocation5] sm:$0xff]
    %v46 = vld [vmem:[#allocation5 + $0x8] sm:$0xff]
    %v47 = vld [vmem:[#allocation5 + $0x10] sm:$0xff]
    %v48 = vld [vmem:[#allocation5 + $0x18] sm:$0xff]
    %v49 = vld [vmem:[#allocation5 + $0x20] sm:$0xff]
    %v50 = vld [vmem:[#allocation5 + $0x28] sm:$0xff]
    %v51 = vld [vmem:[#allocation5 + $0x30] sm:$0xff]
    %v52 = vld [vmem:[#allocation5 + $0x38] sm:$0xff]
    %v53 = vld [vmem:[#allocation5 + $0x40] sm:$0xff]
    %v54 = vld [vmem:[#allocation5 + $0x48] sm:$0xff]
    %v55 = vld [vmem:[#allocation5 + $0x50] sm:$0xff]
    %v56 = vld [vmem:[#allocation5 + $0x58] sm:$0xff]
    %v57 = vld [vmem:[#allocation5 + $0x60] sm:$0xff]
    %v58 = vld [vmem:[#allocation5 + $0x68] sm:$0xff]
    %v59 = vld [vmem:[#allocation5 + $0x70] sm:$0xff]
    %v60 = vld [vmem:[#allocation5 + $0x78] sm:$0xff]
    %v61 = vld [vmem:[%s2] sm:$0x1]
    %v63 = vlaneseq
    %v64 = vshrl.u32 %v63, 7
    %v65 = vsub.s32 0, %v64
    %v66 = vrot.slane %v61, %v65
    %68 = vmatprep.subr.mxu0 0.0
    %69 = vmatpush1.msra.mxu0 %v45
    %70 = vmatprep.subr.mxu0 0.0
    %71 = vmatpush1.msra.mxu0 %v46
    %72 = vmatprep.subr.mxu0 0.0
    %73 = vmatpush1.msra.mxu0 %v47
    %74 = vmatprep.subr.mxu0 0.0
    %75 = vmatpush1.msra.mxu0 %v48
    %76 = vmatprep.subr.mxu0 0.0
    %77 = vmatpush1.msra.mxu0 %v49
    %78 = vmatprep.subr.mxu0 0.0
    %79 = vmatpush1.msra.mxu0 %v50
    %80 = vmatprep.subr.mxu0 0.0
    %81 = vmatpush1.msra.mxu0 %v51
    %82 = vmatprep.subr.mxu0 0.0
    %83 = vmatpush1.msra.mxu0 %v52
    %84 = vmatprep.subr.mxu0 0.0
    %85 = vmatpush1.msra.mxu0 %v53
    %86 = vmatprep.subr.mxu0 0.0
    %87 = vmatpush1.msra.mxu0 %v54
    %88 = vmatprep.subr.mxu0 0.0
    %89 = vmatpush1.msra.mxu0 %v55
    %90 = vmatprep.subr.mxu0 0.0
    %91 = vmatpush1.msra.mxu0 %v56
    %92 = vmatprep.subr.mxu0 0.0
    %93 = vmatpush1.msra.mxu0 %v57
    %94 = vmatprep.subr.mxu0 0.0
    %95 = vmatpush1.msra.mxu0 %v58
    %96 = vmatprep.subr.mxu0 0.0
    %97 = vmatpush1.msra.mxu0 %v59
    %98 = vmatprep.subr.mxu0 0.0
    %99 = vmatpush1.msra.mxu0 %v60
    %100 = vmatprep.subr.mxu0 0.0
    %101 = vmatpush1.msra.mxu0 0.0
    %102 = vmatprep.subr.mxu0 0.0
    %103 = vmatpush1.msra.mxu0 0.0
    %104 = vmatprep.subr.mxu0 0.0
    %105 = vmatpush1.msra.mxu0 0.0
    %106 = vmatprep.subr.mxu0 0.0
    %107 = vmatpush1.msra.mxu0 0.0
    %108 = vmatprep.subr.mxu0 0.0
    %109 = vmatpush1.msra.mxu0 0.0
    %110 = vmatprep.subr.mxu0 0.0
    %111 = vmatpush1.msra.mxu0 0.0
    %112 = vmatprep.subr.mxu0 0.0
    %113 = vmatpush1.msra.mxu0 0.0
    %114 = vmatprep.subr.mxu0 0.0
    %115 = vmatpush1.msra.mxu0 0.0
    %116 = vmatprep.subr.mxu0 0.0
    %117 = vmatpush1.msra.mxu0 0.0
    %118 = vmatprep.subr.mxu0 0.0
    %119 = vmatpush1.msra.mxu0 0.0
    %120 = vmatprep.subr.mxu0 0.0
    %121 = vmatpush1.msra.mxu0 0.0
    %122 = vmatprep.subr.mxu0 0.0
    %123 = vmatpush1.msra.mxu0 0.0
    %124 = vmatprep.subr.mxu0 0.0
    %125 = vmatpush1.msra.mxu0 0.0
    %126 = vmatprep.subr.mxu0 0.0
    %127 = vmatpush1.msra.mxu0 0.0
    %128 = vmatprep.subr.mxu0 0.0
    %129 = vmatpush1.msra.mxu0 0.0
    %130 = vmatprep.subr.mxu0 0.0
    %131 = vmatpush1.msra.mxu0 0.0
    %132 = vmatprep.mubr.f32.mxu0 0.0
    %133 = vmatmul.mubr.f32.gmra.mrb[0].mxu0 %v43
    %v134 = vpop.f32.mrb[0].mxu0
    %v135 = vadd.f32 %v66, %v134
    %v136 = vpop.f32.mrb[0].mxu0
    %137 = vmatprep.mubr.f32.mxu0 0.0
    %138 = vmatmul.mubr.f32.gmra.mrb[0].mxu0 %v44
    %v139 = vpop.f32.mrb[0].mxu0
    %v140 = vadd.f32 %v66, %v139
    %v141 = vpop.f32.mrb[0].mxu0
    %142 = vdwg.mxu0
    %143 = vst [vmem:[#allocation7] sm:$0xff] %v135
    %144 = vst [vmem:[#allocation7 + $0x8] sm:$0xff] %v140
    // Predicated region
    $region22: #{tpu_custom_call.1} parent=1 // pred_check
      _
    $region23: #{tpu_custom_call.1} parent=1 // pred_check_branch
      %146 = sbr.rel (0) target = $region25
    $region24: #{tpu_custom_call.1} parent=1 // pred_region
      %s148 = ssub.s32 256, 256
      %149 = vsyncadd [#allocation4], %s148
      %s150 = sshll.u32 [#allocation7], 4
      %s151 = int_to_ptr.vmem [resolvable:$true] %s150
      %156 = dma.vmem_to_hbm [thread:$0]  %s151, 256, %s3, [#allocation4], 128, 128, 8
    $region25: #{tpu_custom_call.1} parent=1 // pred_fallthru
      _
    // Predicated region
    $region26: #{tpu_custom_call.1} parent=1 // pred_check
      _
    $region27: #{tpu_custom_call.1} parent=1 // pred_check_branch
      %158 = sbr.rel (0) target = $region29
    $region28: #{tpu_custom_call.1} parent=1 // pred_region
      %159 = dma.done [#allocation4], 256
    $region29: #{tpu_custom_call.1} parent=1 // pred_fallthru
      _
    %160 = vsyncpa [#allocation3], 1
    %161 = vsyncpa [#allocation6], 1
    %162 = vsyncpa [#allocation4], 1

</llo_original>
